<compile_context>
chip_gen: v6e
topology: v6e:2x2x1
jax: 0.10.0
libtpu: 0.0.40
codegen_flags: <defaults>
</compile_context>

<pallas_src>
import math

import jax
import jax.numpy as jnp
from jax.experimental import pallas as pl
from jax.experimental.pallas import tpu as pltpu

_MIN_GRID = 4  # minimum grid depth for sizeable tensors (pipelining + v7x 2 TC)


def _sinlu_scalar_kernel(x_ref, a_ref, b_ref, o_ref):
    # x_ref: (tm, L) VMEM tile; a_ref/b_ref: (1,) f32 scalars in SMEM.
    x = x_ref[...].astype(jnp.float32)
    a = a_ref[0]
    b = b_ref[0]
    # tanh-based logistic: the transcendental goes to the EUP slot, keeping
    # the VALU slots free for the sin range-reduction polynomial.
    sig = 0.5 * (jnp.tanh(0.5 * x) + 1.0)
    y = sig * (x + a * jnp.sin(b * x))
    o_ref[...] = y.astype(o_ref.dtype)


def _sinlu_vector_kernel(x_ref, a_ref, b_ref, o_ref):
    # x_ref: (tm, L) VMEM tile; a_ref/b_ref: (1, L) f32, VMEM-resident.
    x = x_ref[...].astype(jnp.float32)
    a = a_ref[...]
    b = b_ref[...]
    sig = 0.5 * (jnp.tanh(0.5 * x) + 1.0)
    y = sig * (x + a * jnp.sin(b * x))
    o_ref[...] = y.astype(o_ref.dtype)


def _tpu_budgets():
    """(target_block_bytes, vmem_limit_bytes) tuned per TPU generation."""
    vmem = 64 * 1024 * 1024
    try:
        info = pltpu.get_tpu_info()
        vmem = int(getattr(info, "vmem_capacity_bytes", vmem))
    except Exception:
        pass
    if vmem >= 128 * 1024 * 1024:  # v5e / v6e: big VMEM -> bigger blocks
        return 8 * 1024 * 1024, 48 * 1024 * 1024
    return 4 * 1024 * 1024, 32 * 1024 * 1024  # v7x: 64 MiB physical VMEM


def _row_tile(n_rows, L, itemsize, sublane, target_block_bytes):
    """Row-block size (multiple of the dtype's sublane pack) and grid depth."""
    if n_rows <= sublane:
        return int(n_rows), 1  # full-extent sublane block, single step
    tm = max(sublane, (target_block_bytes // (L * itemsize)) // sublane * sublane)
    if n_rows * L * itemsize > 2 * 1024 * 1024:
        # Sizeable tensor: never collapse to one grid step (keep pipelining
        # and both v7x TensorCores busy). Even grid depth preferred for TC
        # balance; ragged tails are handled by the cdiv grid.
        tm = min(tm, max(sublane, (n_rows // _MIN_GRID) // sublane * sublane))
    tm = min(tm, max(sublane, (n_rows // sublane) * sublane))
    return int(tm), int(pl.cdiv(n_rows, tm))


def sinlu(x, a, b, *, lane=1024):
    """SinLU elementwise: sigmoid(x) * (x + a * sin(b * x)).

    a, b are 1-D parameter vectors with PyTorch trailing-axis broadcast:
    their length must be 1 or x.shape[-1].
    """
    orig_shape = x.shape
    total = int(x.size)
    if total == 0:
        return x
    D = int(orig_shape[-1]) if len(orig_shape) >= 1 else 1
    itemsize = jnp.dtype(x.dtype).itemsize
    sublane = max(8, 32 // itemsize)          # 8 f32 / 16 bf16 / 32 int8
    lane = max(128, (int(lane) // 128) * 128)
    target_block_bytes, vmem_limit = _tpu_budgets()

    a32 = jnp.asarray(a, jnp.float32).reshape(-1)
    b32 = jnp.asarray(b, jnp.float32).reshape(-1)
    pdim = int(a32.shape[0])
    if pdim not in (1, D):
        raise ValueError(f"SinLU parameter dim {pdim} must be 1 or x.shape[-1]={D}")
    scalar_params = pdim == 1

    L = None
    if scalar_params:
        # Any lane-dense repacking is valid: largest multiple of 128 (<= lane)
        # that DIVIDES the element count -> free reshape, no pad/slice pass.
        for cand in range(lane, 127, -128):
            if total % cand == 0:
                L = cand
                break
        if L is None:
            L = D  # fallback: full-extent last-dim lane blocks, masked lanes
        params = (a32, b32)
    else:
        if D % 128 == 0:
            # Fast path: hidden size already lane-aligned; params stay one
            # resident (1, D) VMEM block, no host-side tiling.
            L = D
            params = (a32.reshape(1, D), b32.reshape(1, D))
        else:
            base = math.lcm(D, 128)
            if total % base == 0 and base * sublane * itemsize <= target_block_bytes:
                k = max(1, lane // base)
                while k > 1 and total % (base * k) != 0:
                    k -= 1
                L = base * k
                reps = L // D
                params = (jnp.tile(a32, reps).reshape(1, L),
                          jnp.tile(b32, reps).reshape(1, L))
            else:
                # Guard: lcm block too large for VMEM (v7x) or size not
                # divisible -> keep lane = D (full-extent last dim).  Correct,
                # no padding, at worst partially-masked lanes.
                L = D
                params = (a32.reshape(1, D), b32.reshape(1, D))

    n_rows = total // L
    x2 = x.reshape(n_rows, L)  # contiguous reshape: no pad / extra HBM pass
    tm, grid_m = _row_tile(n_rows, L, itemsize, sublane, target_block_bytes)

    x_spec = pl.BlockSpec((tm, L), lambda i: (i, 0))
    if scalar_params:
        kernel = _sinlu_scalar_kernel
        param_specs = [
            pl.BlockSpec(memory_space=pltpu.MemorySpace.SMEM),
            pl.BlockSpec(memory_space=pltpu.MemorySpace.SMEM),
        ]
    else:
        kernel = _sinlu_vector_kernel
        param_specs = [
            pl.BlockSpec((1, L), lambda i: (0, 0)),
            pl.BlockSpec((1, L), lambda i: (0, 0)),
        ]

    out2 = pl.pallas_call(
        kernel,
        out_shape=jax.ShapeDtypeStruct((n_rows, L), x.dtype),
        grid_spec=pltpu.PrefetchScalarGridSpec(
            num_scalar_prefetch=0,
            grid=(grid_m,),
            in_specs=[x_spec] + param_specs,
            out_specs=pl.BlockSpec((tm, L), lambda i: (i, 0)),
        ),
        compiler_params=pltpu.CompilerParams(
            dimension_semantics=("parallel",),
            vmem_limit_bytes=vmem_limit,
        ),
    )(x2, *params)

    return out2.reshape(orig_shape)


def _reference(x, a, b):
    xf = x.astype(jnp.float32)
    a = jnp.asarray(a, jnp.float32)
    b = jnp.asarray(b, jnp.float32)
    return (jax.nn.sigmoid(xf) * (xf + a * jnp.sin(b * xf))).astype(x.dtype)


if __name__ == "__main__":
    key = jax.random.PRNGKey(0)
    k1, k2, k3, k4 = jax.random.split(key, 4)

    # 1) Default SinLU: dim=None -> dim=1, a=b=ones -> scalar broadcast.
    a1 = jnp.ones((1,), dtype=jnp.float32)
    b1 = jnp.ones((1,), dtype=jnp.float32)
    x1 = jax.random.normal(k1, (2, 4, 16, 16), dtype=jnp.float32)   # NCHW
    out1 = jax.block_until_ready(sinlu(x1, a1, b1))
    ref1 = _reference(x1, a1, b1)
    assert out1.shape == x1.shape
    assert jnp.allclose(out1, ref1, atol=1e-5, rtol=1e-5)

    # 2) dim=1 with an element count NOT divisible by 128 (exercises the
    #    no-pad full-extent-lane fallback + ragged row tail).
    x2 = jax.random.normal(k2, (2, 3, 7, 16), dtype=jnp.float32)
    out2 = jax.block_until_ready(sinlu(x2, a1, b1))
    ref2 = _reference(x2, a1, b1)
    assert out2.shape == x2.shape
    assert jnp.allclose(out2, ref2, atol=1e-5, rtol=1e-5)

    # 3) Per-channel parameters: dim == x.shape[-1] (vector path, params tiled
    #    to the packed lane width, no padding needed).
    dim3 = 16
    a3 = jnp.linspace(0.5, 1.5, dim3, dtype=jnp.float32)
    b3 = jnp.linspace(0.8, 1.2, dim3, dtype=jnp.float32)
    x3 = jax.random.normal(k3, (2, 4, 16, 16), dtype=jnp.float32)
    out3 = jax.block_until_ready(sinlu(x3, a3, b3))
    ref3 = _reference(x3, a3, b3)
    assert out3.shape == x3.shape
    assert jnp.allclose(out3, ref3, atol=1e-5, rtol=1e-5)

    # 4) bf16 input, scalar params (exercises the 16-row sublane packing).
    x4 = jax.random.normal(k4, (4, 8, 256), dtype=jnp.bfloat16)
    out4 = jax.block_until_ready(sinlu(x4, a1, b1))
    ref4 = _reference(x4, a1, b1)
    assert out4.shape == x4.shape
    assert jnp.allclose(out4.astype(jnp.float32), ref4.astype(jnp.float32),
                        atol=1e-2, rtol=1e-2)

    print("KERNEL_OK")
</pallas_src>

<mosaic_0001>
module attributes {stable_mosaic.version = 11 : i64} {
  func.func @_sinlu_scalar_kernel(%arg0: i32, %arg1: memref<2x1024xf32, #tpu.memory_space<vmem>>, %arg2: memref<1xf32, #tpu.memory_space<smem>>, %arg3: memref<1xf32, #tpu.memory_space<smem>>, %arg4: memref<2x1024xf32, #tpu.memory_space<vmem>>) attributes {dimension_semantics = [#tpu.dimension_semantics<parallel>], iteration_bounds = array<i64: 1>, scalar_prefetch = 0 : i64, scratch_operands = 0 : i64, tpu.core_type = #tpu.core_type<tc>, window_params = [{transform_indices = @transform_0, window_bounds = array<i64: 2, 1024>}, {transform_indices = @transform_1, window_bounds = array<i64: 1>}, {transform_indices = @transform_2, window_bounds = array<i64: 1>}, {transform_indices = @transform_3, window_bounds = array<i64: 2, 1024>}]} {
    %c0 = arith.constant 0 : index
    %c0_0 = arith.constant 0 : index
    %0 = vector.load %arg1[%c0, %c0_0] : memref<2x1024xf32, #tpu.memory_space<vmem>>, vector<2x1024xf32>
    %c0_1 = arith.constant 0 : index
    %1 = memref.load %arg2[%c0_1] : memref<1xf32, #tpu.memory_space<smem>>
    %c0_2 = arith.constant 0 : index
    %2 = memref.load %arg3[%c0_2] : memref<1xf32, #tpu.memory_space<smem>>
    %cst = arith.constant 5.000000e-01 : f32
    %3 = vector.broadcast %cst : f32 to vector<2x1024xf32>
    %4 = arith.mulf %3, %0 : vector<2x1024xf32>
    %5 = math.tanh %4 : vector<2x1024xf32>
    %cst_3 = arith.constant 1.000000e+00 : f32
    %6 = vector.broadcast %cst_3 : f32 to vector<2x1024xf32>
    %7 = arith.addf %5, %6 : vector<2x1024xf32>
    %cst_4 = arith.constant 5.000000e-01 : f32
    %8 = vector.broadcast %cst_4 : f32 to vector<2x1024xf32>
    %9 = arith.mulf %8, %7 : vector<2x1024xf32>
    %10 = vector.broadcast %2 : f32 to vector<2x1024xf32>
    %11 = arith.mulf %10, %0 : vector<2x1024xf32>
    %12 = math.sin %11 : vector<2x1024xf32>
    %13 = vector.broadcast %1 : f32 to vector<2x1024xf32>
    %14 = arith.mulf %13, %12 : vector<2x1024xf32>
    %15 = arith.addf %0, %14 : vector<2x1024xf32>
    %16 = arith.mulf %9, %15 : vector<2x1024xf32>
    %c0_5 = arith.constant 0 : index
    %c0_6 = arith.constant 0 : index
    %17 = vector.load %arg4[%c0_5, %c0_6] : memref<2x1024xf32, #tpu.memory_space<vmem>>, vector<2x1024xf32>
    tpu.vector_store %arg4[%c0_5, %c0_6], %16 {strides = array<i32>} : memref<2x1024xf32, #tpu.memory_space<vmem>>, vector<2x1024xf32>,
    return
  }
  func.func @transform_0(%arg0: i32) -> (i32, i32) {
    %c0_i32 = arith.constant 0 : i32
    %c0_i32_0 = arith.constant 0 : i32
    return %arg0, %c0_i32 : i32, i32
  }
  func.func @transform_1(%arg0: i32) -> i32 {
    %c0_i32 = arith.constant 0 : i32
    %c0_i32_0 = arith.constant 0 : i32
    return %c0_i32 : i32
  }
  func.func @transform_2(%arg0: i32) -> i32 {
    %c0_i32 = arith.constant 0 : i32
    %c0_i32_0 = arith.constant 0 : i32
    return %c0_i32 : i32
  }
  func.func @transform_3(%arg0: i32) -> (i32, i32) {
    %c0_i32 = arith.constant 0 : i32
    %c0_i32_0 = arith.constant 0 : i32
    return %arg0, %c0_i32 : i32, i32
  }
}

</mosaic_0001>

<llo_original>
// kernel: tpu_custom_call.1
$region0: #{tpu_custom_call.1}
  #allocation0 [shape = 'u32[]', space=smem, size = 0x4, offset = 0x4, fixed_abs, tag = 'smem constant byte address 0x4 - core index']
  #allocation1 [shape = 'u32[144,128]{1,0:T(1,128)}', space=vmem, size = 0x12000, scoped, tag = 'internal scratch']
  #allocation2 [shape = 'f32[1]{0:T(128)S(6)}', space=smem, size = 0x200, scoped, tag = 'scoped memory for tpu_custom_call.1']
  #allocation3 [shape = 'f32[1]{0:T(128)S(6)}', space=smem, size = 0x200, scoped, tag = 'scoped memory for tpu_custom_call.1']
  %s0 = inlined_call_operand.hbm [shape: f32[2,1024], index: 0, kind: input, shape index: {}]
  %s1 = inlined_call_operand.<no memory space> [shape: f32[1], index: 1, kind: input, shape index: {}]
  %s2 = inlined_call_operand.<no memory space> [shape: f32[1], index: 2, kind: input, shape index: {}]
  %s3 = inlined_call_operand.hbm [shape: f32[2,1024], index: 3, kind: output, shape index: {}]
  %s4 = sld [smem:[#allocation0]]
  $region26: #{tpu_custom_call.1} parent=0
    _
  %s6 = ssub.s32 1, %s4
  %s7 = scalar_select 0, %s6, %s4
  %8 = sst [smem:[#allocation2]] %s1
  %9 = sst [smem:[#allocation3]] %s2
  $region1: #{tpu_custom_call.1} parent=0
    #allocation4 [shape = 'u8[8192]{0}', space=vmem, size = 0x2000, scoped, tag = 'input window, operand 0, single buffered']
    #allocation5 [shape = 's32[1]{0}', space=sflag, size = 0x4, scoped, tag = 'scoped memory for tpu_custom_call.1']
    #allocation6 [shape = 's32[1]{0}', space=sflag, size = 0x4, scoped, tag = 'scoped memory for tpu_custom_call.1']
    #allocation7 [shape = 'u8[8192]{0}', space=vmem, size = 0x2000, scoped, tag = 'output window, operand 0, single buffered']
    %10 = vsyncpa [#allocation5], 0
    %11 = vsyncpa [#allocation6], 0
    // Predicated region
    $region2: #{tpu_custom_call.1} parent=1 // pred_check
      _
    $region3: #{tpu_custom_call.1} parent=1 // pred_check_branch
      %13 = sbr.rel (0) target = $region5
    $region4: #{tpu_custom_call.1} parent=1 // pred_region
      %s15 = ssub.s32 256, 256
      %16 = vsyncadd [#allocation5], %s15
      %s18 = sshll.u32 [#allocation4], 4
      %s19 = int_to_ptr.vmem [resolvable:$true] %s18
      %21 = dma.hbm_to_vmem [thread:$0]  %s0, 256, %s19, [#allocation5]
    $region5: #{tpu_custom_call.1} parent=1 // pred_fallthru
      _
    // Predicated region
    $region6: #{tpu_custom_call.1} parent=1 // pred_check
      _
    $region7: #{tpu_custom_call.1} parent=1 // pred_check_branch
      %23 = sbr.rel (0) target = $region9
    $region8: #{tpu_custom_call.1} parent=1 // pred_region
      _
    $region9: #{tpu_custom_call.1} parent=1 // pred_fallthru
      _
    // Predicated region
    $region10: #{tpu_custom_call.1} parent=1 // pred_check
      _
    $region11: #{tpu_custom_call.1} parent=1 // pred_check_branch
      %25 = sbr.rel (0) target = $region13
    $region12: #{tpu_custom_call.1} parent=1 // pred_region
      _
    $region13: #{tpu_custom_call.1} parent=1 // pred_fallthru
      _
    // Predicated region
    $region14: #{tpu_custom_call.1} parent=1 // pred_check
      _
    $region15: #{tpu_custom_call.1} parent=1 // pred_check_branch
      %27 = sbr.rel (0) target = $region17
    $region16: #{tpu_custom_call.1} parent=1 // pred_region
      %28 = dma.done [#allocation5], 256
    $region17: #{tpu_custom_call.1} parent=1 // pred_fallthru
      _
    %v29 = vld [vmem:[#allocation4] sm:$0xff]
    %v30 = vld [vmem:[#allocation4 + $0x8] sm:$0xff]
    %s31 = sld [smem:[#allocation2]]
    %s32 = sld [smem:[#allocation3]]
    %v33 = vmul.f32 %v29, 0.5
    %v34 = vmul.f32 %v30, 0.5
    %v35 = vtanh.pop %v33
    %v36 = vtanh.pop %v34
    %v37 = vadd.f32 %v35, 1.0
    %v38 = vadd.f32 %v36, 1.0
    %v39 = vmul.f32 %v37, 0.5
    %v40 = vmul.f32 %v38, 0.5
    %v41 = vstv %s32
    %v42 = vmul.f32 %v41, %v29
    %v43 = vmul.f32 %v41, %v30
    %v44 = vand.u32 2147483647, %v42
    %vm45 = vcmp.le.f32.partialorder %v44, 0.7853982
    %vm46 = vcmp.lt.s32.totalorder %v42, 0
    %v47 = vand.u32 %v42, 2139095040
    %v48 = vshrl.u32 %v47, 23
    %v49 = vsub.s32 %v48, 127
    %v50 = vand.u32 2147483647, %v42
    %v51 = vand.u32 %v50, 8388607
    %v52 = vor.u32 %v51, 8388608
    %v53 = vsub.s32 0, %v52
    %v54 = vadd.s32 %v49, 1
    %vm55 = vcmp.gt.s32.totalorder %v54, 0
    %v56 = vsel %vm55, %v54, 0
    %v57 = vshrl.u32 %v56, 5
    %v58 = vand.u32 %v56, 31
    %v59 = vsub.s32 32, %v58
    %v60 = vshrl.u32 683565275, %v59
    %v61 = vshll.u32 683565275, %v58
    %v62 = vshrl.u32 2475754826, %v59
    %v63 = vor.u32 %v61, %v62
    %v64 = vshll.u32 2475754826, %v58
    %v65 = vshrl.u32 2131351028, %v59
    %v66 = vor.u32 %v64, %v65
    %v67 = vshll.u32 2131351028, %v58
    %v68 = vshrl.u32 2102212464, %v59
    %v69 = vor.u32 %v67, %v68
    %v70 = vshll.u32 2102212464, %v58
    %v71 = vshrl.u32 920167782, %v59
    %v72 = vor.u32 %v70, %v71
    %v73 = vshll.u32 920167782, %v58
    %v74 = vshrl.u32 1326507024, %v59
    %v75 = vor.u32 %v73, %v74
    %vm76 = vcmp.lt.s32.totalorder %v57, 1
    %vm77 = vcmp.lt.s32.totalorder %v57, 2
    %vm78 = vcmp.lt.s32.totalorder %v57, 3
    %vm79 = vcmp.lt.s32.totalorder %v57, 4
    %v80 = vsel %vm76, %v60, %v63
    %v81 = vsel %vm79, %v69, 2102212464
    %v82 = vsel %vm78, %v66, %v81
    %v83 = vsel %vm77, %v80, %v82
    %v84 = vsel %vm76, %v63, %v66
    %v85 = vsel %vm79, %v72, 920167782
    %v86 = vsel %vm78, %v69, %v85
    %v87 = vsel %vm77, %v84, %v86
    %v88 = vsel %vm76, %v66, %v69
    %v89 = vsel %vm79, %v75, 1326507024
    %v90 = vsel %vm78, %v72, %v89
    %v91 = vsel %vm77, %v88, %v90
    %v92 = vshll.u32 %v52, 8
    %v93 = vmul.u32.u64.compose %v92, %v91
    %v94 = vextract.low.u32 %v93
    %v95 = vextract.high.u32 %v93
    %v96 = vmul.u32.u64.compose %v92, %v87
    %v97 = vextract.low.u32 %v96
    %v98 = vextract.high.u32 %v96
    %v99 = vmul.u32 %v92, %v83
    %v100 = vadd.s32 %v95, %v97
    %vm101 = vc.u32 %v95, %v97
    %v102 = vadd.s32 %v98, 1
    %v103 = vsel %vm101, %v102, %v98
    %v104 = vadd.s32 %v99, %v103
    %v105 = vadd.s32 %v104, 536870912
    %v106 = vshrl.u32 %v105, 30
    %v107 = vshll.u32 %v106, 30
    %v108 = vsub.s32 %v104, %v107
    %vm109 = vcmp.lt.s32.totalorder %v108, 0
    %v110 = vsub.s32 0, %v108
    %v111 = vsel %vm109, %v110, %v108
    %v112 = vclz %v111
    %v113 = vsub.s32 %v112, 2
    %vm114 = vcmp.gt.s32.totalorder 0, %v113
    %v115 = vsel %vm114, 0, %v113
    %v116 = vsub.s32 32, %v115
    %v117 = vshll.u32 %v108, %v115
    %v118 = vshrl.u32 %v100, %v116
    %v119 = vor.u32 %v117, %v118
    %v120 = vsub.s32 4294967266, %v115
    %v121 = vadd.s32 %v120, 127
    %v122 = vshll.u32 %v121, 23
    %v123 = vor.u32 4788187, %v122
    %v124 = vand.u32 2147483647, %v123
    %v126 = vcvt.s32.f32 %v119
    %v127 = vmul.f32 %v126, %v124
    %v128 = vxor.u32 %v127, 2147483648
    %v129 = vsel %vm46, %v128, %v127
    %v130 = vsub.s32 4, %v106
    %v131 = vsel %vm46, %v130, %v106
    %v132 = vsel %vm45, %v42, %v129
    %v133 = vsel %vm45, 0, %v131
    %v134 = vcosq.f32.pop %v132
    %v135 = vsinq.f32.pop %v132
    %vm136 = vweird.f32 %v42
    %v137 = vadd.s32 %v133, 3
    %v138 = vand.u32 %v137, 3
    %vm139 = vcmp.lt.s32.totalorder %v138, 2
    %vm140 = vcmp.eq.s32.totalorder %v138, 0
    %v141 = vxor.u32 %v135, 2147483648
    %v142 = vsel %vm140, %v134, %v141
    %vm143 = vcmp.eq.s32.totalorder %v138, 2
    %v144 = vxor.u32 %v134, 2147483648
    %v145 = vsel %vm143, %v144, %v135
    %v146 = vsel %vm139, %v142, %v145
    %v147 = vsel %vm136, nan, %v146
    %v148 = vand.u32 2147483647, %v43
    %vm149 = vcmp.le.f32.partialorder %v148, 0.7853982
    %vm150 = vcmp.lt.s32.totalorder %v43, 0
    %v151 = vand.u32 %v43, 2139095040
    %v152 = vshrl.u32 %v151, 23
    %v153 = vsub.s32 %v152, 127
    %v154 = vand.u32 2147483647, %v43
    %v155 = vand.u32 %v154, 8388607
    %v156 = vor.u32 %v155, 8388608
    %v157 = vsub.s32 0, %v156
    %v158 = vadd.s32 %v153, 1
    %vm159 = vcmp.gt.s32.totalorder %v158, 0
    %v160 = vsel %vm159, %v158, 0
    %v161 = vshrl.u32 %v160, 5
    %v162 = vand.u32 %v160, 31
    %v163 = vsub.s32 32, %v162
    %v164 = vshrl.u32 683565275, %v163
    %v165 = vshll.u32 683565275, %v162
    %v166 = vshrl.u32 2475754826, %v163
    %v167 = vor.u32 %v165, %v166
    %v168 = vshll.u32 2475754826, %v162
    %v169 = vshrl.u32 2131351028, %v163
    %v170 = vor.u32 %v168, %v169
    %v171 = vshll.u32 2131351028, %v162
    %v172 = vshrl.u32 2102212464, %v163
    %v173 = vor.u32 %v171, %v172
    %v174 = vshll.u32 2102212464, %v162
    %v175 = vshrl.u32 920167782, %v163
    %v176 = vor.u32 %v174, %v175
    %v177 = vshll.u32 920167782, %v162
    %v178 = vshrl.u32 1326507024, %v163
    %v179 = vor.u32 %v177, %v178
    %vm180 = vcmp.lt.s32.totalorder %v161, 1
    %vm181 = vcmp.lt.s32.totalorder %v161, 2
    %vm182 = vcmp.lt.s32.totalorder %v161, 3
    %vm183 = vcmp.lt.s32.totalorder %v161, 4
    %v184 = vsel %vm180, %v164, %v167
    %v185 = vsel %vm183, %v173, 2102212464
    %v186 = vsel %vm182, %v170, %v185
    %v187 = vsel %vm181, %v184, %v186
    %v188 = vsel %vm180, %v167, %v170
    %v189 = vsel %vm183, %v176, 920167782
    %v190 = vsel %vm182, %v173, %v189
    %v191 = vsel %vm181, %v188, %v190
    %v192 = vsel %vm180, %v170, %v173
    %v193 = vsel %vm183, %v179, 1326507024
    %v194 = vsel %vm182, %v176, %v193
    %v195 = vsel %vm181, %v192, %v194
    %v196 = vshll.u32 %v156, 8
    %v197 = vmul.u32.u64.compose %v196, %v195
    %v198 = vextract.low.u32 %v197
    %v199 = vextract.high.u32 %v197
    %v200 = vmul.u32.u64.compose %v196, %v191
    %v201 = vextract.low.u32 %v200
    %v202 = vextract.high.u32 %v200
    %v203 = vmul.u32 %v196, %v187
    %v204 = vadd.s32 %v199, %v201
    %vm205 = vc.u32 %v199, %v201
    %v206 = vadd.s32 %v202, 1
    %v207 = vsel %vm205, %v206, %v202
    %v208 = vadd.s32 %v203, %v207
    %v209 = vadd.s32 %v208, 536870912
    %v210 = vshrl.u32 %v209, 30
    %v211 = vshll.u32 %v210, 30
    %v212 = vsub.s32 %v208, %v211
    %vm213 = vcmp.lt.s32.totalorder %v212, 0
    %v214 = vsub.s32 0, %v212
    %v215 = vsel %vm213, %v214, %v212
    %v216 = vclz %v215
    %v217 = vsub.s32 %v216, 2
    %vm218 = vcmp.gt.s32.totalorder 0, %v217
    %v219 = vsel %vm218, 0, %v217
    %v220 = vsub.s32 32, %v219
    %v221 = vshll.u32 %v212, %v219
    %v222 = vshrl.u32 %v204, %v220
    %v223 = vor.u32 %v221, %v222
    %v224 = vsub.s32 4294967266, %v219
    %v225 = vadd.s32 %v224, 127
    %v226 = vshll.u32 %v225, 23
    %v227 = vor.u32 4788187, %v226
    %v228 = vand.u32 2147483647, %v227
    %v230 = vcvt.s32.f32 %v223
    %v231 = vmul.f32 %v230, %v228
    %v232 = vxor.u32 %v231, 2147483648
    %v233 = vsel %vm150, %v232, %v231
    %v234 = vsub.s32 4, %v210
    %v235 = vsel %vm150, %v234, %v210
    %v236 = vsel %vm149, %v43, %v233
    %v237 = vsel %vm149, 0, %v235
    %v238 = vcosq.f32.pop %v236
    %v239 = vsinq.f32.pop %v236
    %vm240 = vweird.f32 %v43
    %v241 = vadd.s32 %v237, 3
    %v242 = vand.u32 %v241, 3
    %vm243 = vcmp.lt.s32.totalorder %v242, 2
    %vm244 = vcmp.eq.s32.totalorder %v242, 0
    %v245 = vxor.u32 %v239, 2147483648
    %v246 = vsel %vm244, %v238, %v245
    %vm247 = vcmp.eq.s32.totalorder %v242, 2
    %v248 = vxor.u32 %v238, 2147483648
    %v249 = vsel %vm247, %v248, %v239
    %v250 = vsel %vm243, %v246, %v249
    %v251 = vsel %vm240, nan, %v250
    %v252 = vstv %s31
    %v253 = vmul.f32 %v252, %v147
    %v254 = vmul.f32 %v252, %v251
    %v255 = vadd.f32 %v29, %v253
    %v256 = vadd.f32 %v30, %v254
    %v257 = vmul.f32 %v39, %v255
    %v258 = vmul.f32 %v40, %v256
    %259 = vst [vmem:[#allocation7] sm:$0xff] %v257
    %260 = vst [vmem:[#allocation7 + $0x8] sm:$0xff] %v258
    // Predicated region
    $region18: #{tpu_custom_call.1} parent=1 // pred_check
      _
    $region19: #{tpu_custom_call.1} parent=1 // pred_check_branch
      %262 = sbr.rel (0) target = $region21
    $region20: #{tpu_custom_call.1} parent=1 // pred_region
      %s264 = ssub.s32 256, 256
      %265 = vsyncadd [#allocation6], %s264
      %s267 = sshll.u32 [#allocation7], 4
      %s268 = int_to_ptr.vmem [resolvable:$true] %s267
      %270 = dma.vmem_to_hbm [thread:$0]  %s268, 256, %s3, [#allocation6]
    $region21: #{tpu_custom_call.1} parent=1 // pred_fallthru
      _
    // Predicated region
    $region22: #{tpu_custom_call.1} parent=1 // pred_check
      _
    $region23: #{tpu_custom_call.1} parent=1 // pred_check_branch
      %272 = sbr.rel (0) target = $region25
    $region24: #{tpu_custom_call.1} parent=1 // pred_region
      %273 = dma.done [#allocation6], 256
    $region25: #{tpu_custom_call.1} parent=1 // pred_fallthru
      _
    %274 = vsyncpa [#allocation5], 1
    %275 = vsyncpa [#allocation6], 1

</llo_original>
